<compile_context>
chip_gen: v7x
topology: tpu7x:2x2x1
jax: 0.10.0
libtpu: 0.0.40
codegen_flags: <defaults>
</compile_context>

<pallas_src>
import jax
import jax.numpy as jnp
from jax.experimental import pallas as pl
from jax.experimental.pallas import tpu as pltpu

_MIB = 1 << 20


def _relu_kernel(x_ref, o_ref):
    # Elementwise max with 0 on the VPU.
    o_ref[...] = jnp.maximum(x_ref[...], jnp.zeros((), dtype=x_ref.dtype))


def _vmem_budget_bytes():
    """Scoped-VMEM budget derived from the chip's physical VMEM capacity."""
    try:
        cap = int(pltpu.get_tpu_info().vmem_capacity_bytes)
    except Exception:
        cap = 64 * _MIB  # conservative (v7x-sized) fallback
    # Keep the pipeline footprint (~4x block bytes with in+out double
    # buffering) well inside physical VMEM: v5e/v6e (128 MiB) -> 32 MiB budget,
    # v7x (64 MiB) -> 16 MiB budget.
    return min(cap // 4, 32 * _MIB)


def _lane_dense_2d(total):
    """Pick a lane-dense (rows, cols) 2D view of the flattened array.

    Returns (rows, cols, pad): pad trailing elements are appended so that
    rows * cols == total + pad. Preference order:
      1) cols a multiple of 128 dividing total (unmasked full-lane stores),
      2) the divisor of total in [128, total//8] minimizing the padded (8,128)
         vreg footprint (ties -> widest lanes),
      3) prime/tiny totals: pad up to a full (8,128) vreg multiple.
    """
    for cols in (8192, 4096, 2048, 1024, 512, 256, 128):
        if total % cols == 0:
            return total // cols, cols, 0

    best = None
    hi = min(total // 8, 16384)
    for cols in range(128, hi + 1):
        if total % cols:
            continue
        rows = total // cols
        padded = (-(-rows // 8) * 8) * (-(-cols // 128) * 128)
        if (best is None or padded < best[0]
                or (padded == best[0] and cols > best[2])):
            best = (padded, rows, cols)
    if best is not None:
        return best[1], best[2], 0

    # Prime / awkward totals: pad to a (8,128)-aligned size instead of a
    # (1, N) view that wastes 7/8 of every vreg.
    padded_total = -(-total // 1024) * 1024
    return padded_total // 128, 128, padded_total - total


def relu_pallas(x: jax.Array) -> jax.Array:
    orig_shape = x.shape
    total = x.size
    rows, cols, pad = _lane_dense_2d(total)

    if pad:
        flat = jnp.pad(jnp.reshape(x, (total,)), (0, pad))
        x2 = jnp.reshape(flat, (rows, cols))
    else:
        x2 = jnp.reshape(x, (rows, cols))

    itemsize = x2.dtype.itemsize
    nbytes = rows * cols * itemsize
    cost = pl.CostEstimate(flops=rows * cols, transcendentals=0,
                           bytes_accessed=2 * nbytes)

    if nbytes <= _MIB:
        # Launch-bound regime: one grid point, whole array resident in VMEM.
        out2 = pl.pallas_call(
            _relu_kernel,
            out_shape=jax.ShapeDtypeStruct((rows, cols), x.dtype),
            in_specs=[pl.BlockSpec(memory_space=pltpu.MemorySpace.VMEM)],
            out_specs=pl.BlockSpec(memory_space=pltpu.MemorySpace.VMEM),
            input_output_aliases={0: 0},
            cost_estimate=cost,
        )(x2)
    else:
        budget = _vmem_budget_bytes()
        # in + out, double buffered -> ~4x block bytes live in VMEM; keep that
        # at <= budget/2 for headroom.
        block_bytes = min(4 * _MIB, budget // 8)
        # Sublane packing multiple: 8 rows (f32), 16 (bf16/f16), 32 (int8/fp8).
        row_mult = 8 * max(1, 4 // itemsize)
        target_rows = max(
            row_mult,
            (block_bytes // (cols * itemsize)) // row_mult * row_mult)
        block_rows = min(rows, target_rows)
        out2 = pl.pallas_call(
            _relu_kernel,
            out_shape=jax.ShapeDtypeStruct((rows, cols), x.dtype),
            grid=(pl.cdiv(rows, block_rows),),
            in_specs=[pl.BlockSpec((block_rows, cols), lambda i: (i, 0))],
            out_specs=pl.BlockSpec((block_rows, cols), lambda i: (i, 0)),
            input_output_aliases={0: 0},
            cost_estimate=cost,
            compiler_params=pltpu.CompilerParams(
                dimension_semantics=("parallel",),
                vmem_limit_bytes=budget),
        )(x2)

    if pad:
        out2 = jnp.reshape(out2, (rows * cols,))[:total]
    return jnp.reshape(out2, orig_shape)


class M:
    """JAX mirror of the PyTorch module: forward(x) = ReLU(x) (inplace)."""

    def __init__(self):
        # No parameters. Inplace semantics are expressed via input donation at
        # the jit boundary plus input_output_aliases inside the pallas_call.
        # TODO(synk): in a real graph, fuse this ReLU into the producing kernel
        # instead of a standalone pallas_call (removes the extra HBM round-trip).
        self._fn = jax.jit(relu_pallas, donate_argnums=(0,))

    def __call__(self, x):
        return self._fn(x)


if __name__ == "__main__":
    key = jax.random.PRNGKey(0)

    # --- Spec shape: [1, 336, 14, 14], NCHW (single-block path, donated). ---
    x395 = jax.random.normal(key, (1, 336, 14, 14), dtype=jnp.float32)
    ref = jnp.maximum(x395, 0.0)
    in_shape, in_dtype = x395.shape, x395.dtype

    m = M()
    x396 = m(x395)  # x395 is donated (mirrors ReLU(inplace=True))
    jax.block_until_ready(x396)
    assert x396.shape == in_shape and x396.dtype == in_dtype
    assert jnp.array_equal(x396, ref)

    # --- Larger activation: exercises the row-tiled, parallel grid path. ---
    relu_nodonate = jax.jit(relu_pallas)
    k1, k2 = jax.random.split(key)
    big = jax.random.normal(k1, (512, 4096), dtype=jnp.float32)  # 8 MiB
    out_big = relu_nodonate(big)
    jax.block_until_ready(out_big)
    assert jnp.array_equal(out_big, jnp.maximum(big, 0.0))

    # --- Prime-length vector: exercises the padded (8,128)-aligned fallback. -
    odd = jax.random.normal(k2, (2099,), dtype=jnp.float32)
    out_odd = relu_nodonate(odd)
    jax.block_until_ready(out_odd)
    assert out_odd.shape == odd.shape
    assert jnp.array_equal(out_odd, jnp.maximum(odd, 0.0))

    print("KERNEL_OK")
</pallas_src>

<mosaic_0001>
module attributes {stable_mosaic.version = 11 : i64} {
  func.func @_relu_kernel(%arg0: memref<8x8232xf32, #tpu.memory_space<vmem>>, %arg1: memref<8x8232xf32, #tpu.memory_space<vmem>>) attributes {dimension_semantics = [], scalar_prefetch = 0 : i64, scratch_operands = 0 : i64, tpu.core_type = #tpu.core_type<tc>} {
    %c0 = arith.constant 0 : index
    %c0_0 = arith.constant 0 : index
    %0 = vector.load %arg0[%c0, %c0_0] : memref<8x8232xf32, #tpu.memory_space<vmem>>, vector<8x8232xf32>
    %cst = arith.constant 0.000000e+00 : f32
    %1 = vector.broadcast %cst : f32 to vector<8x8232xf32>
    %2 = arith.maximumf %0, %1 : vector<8x8232xf32>
    %c0_1 = arith.constant 0 : index
    %c0_2 = arith.constant 0 : index
    %3 = vector.load %arg1[%c0_1, %c0_2] : memref<8x8232xf32, #tpu.memory_space<vmem>>, vector<8x8232xf32>
    tpu.vector_store %arg1[%c0_1, %c0_2], %2 {strides = array<i32>} : memref<8x8232xf32, #tpu.memory_space<vmem>>, vector<8x8232xf32>,
    return
  }
}

</mosaic_0001>

<llo_original>
// kernel: relu_pallas.1
$region0: #{relu_pallas.1}
  #allocation0 [shape = 'u32[]', space=smem, size = 0x4, offset = 0x4, fixed_abs, tag = 'smem constant byte address 0x4 - core index']
  #allocation1 [shape = 'u32[144,128]{1,0:T(1,128)}', space=vmem, size = 0x12000, scoped, tag = 'internal scratch']
  %s0 = inlined_call_operand.vmem [shape: f32[8,8232], index: 0, kind: input, shape index: {}, may-alias: {0,1}]
  %s1 = inlined_call_operand.vmem [shape: f32[8,8232], index: 1, kind: output, shape index: {}, may-alias: {0,1}]
  %s2 = sld [smem:[#allocation0]]
  $region14: #{relu_pallas.1} parent=0
    _
  %s4 = ssub.s32 1, %s2
  %s5 = scalar_select 0, %s4, %s2
  // Predicated region
  $region2: #{relu_pallas.1} parent=0 // pred_check
    _
  $region3: #{relu_pallas.1} parent=0 // pred_check_branch
    %7 = sbr.rel (0) target = $region5
  $region4: #{relu_pallas.1} parent=0 // pred_region
    _
  $region5: #{relu_pallas.1} parent=0 // pred_fallthru
    _
  %v8 = vld [vmem:[%s0] sm:$0xff]
  %v9 = vld [vmem:[%s0 + $0x8] sm:$0xff]
  %v10 = vld [vmem:[%s0 + $0x10] sm:$0xff]
  %v11 = vld [vmem:[%s0 + $0x18] sm:$0xff]
  %v12 = vld [vmem:[%s0 + $0x20] sm:$0xff]
  %v13 = vld [vmem:[%s0 + $0x28] sm:$0xff]
  %v14 = vld [vmem:[%s0 + $0x30] sm:$0xff]
  %v15 = vld [vmem:[%s0 + $0x38] sm:$0xff]
  %v16 = vld [vmem:[%s0 + $0x40] sm:$0xff]
  %v17 = vld [vmem:[%s0 + $0x48] sm:$0xff]
  %v18 = vld [vmem:[%s0 + $0x50] sm:$0xff]
  %v19 = vld [vmem:[%s0 + $0x58] sm:$0xff]
  %v20 = vld [vmem:[%s0 + $0x60] sm:$0xff]
  %v21 = vld [vmem:[%s0 + $0x68] sm:$0xff]
  %v22 = vld [vmem:[%s0 + $0x70] sm:$0xff]
  %v23 = vld [vmem:[%s0 + $0x78] sm:$0xff]
  %v24 = vld [vmem:[%s0 + $0x80] sm:$0xff]
  %v25 = vld [vmem:[%s0 + $0x88] sm:$0xff]
  %v26 = vld [vmem:[%s0 + $0x90] sm:$0xff]
  %v27 = vld [vmem:[%s0 + $0x98] sm:$0xff]
  %v28 = vld [vmem:[%s0 + $0xa0] sm:$0xff]
  %v29 = vld [vmem:[%s0 + $0xa8] sm:$0xff]
  %v30 = vld [vmem:[%s0 + $0xb0] sm:$0xff]
  %v31 = vld [vmem:[%s0 + $0xb8] sm:$0xff]
  %v32 = vld [vmem:[%s0 + $0xc0] sm:$0xff]
  %v33 = vld [vmem:[%s0 + $0xc8] sm:$0xff]
  %v34 = vld [vmem:[%s0 + $0xd0] sm:$0xff]
  %v35 = vld [vmem:[%s0 + $0xd8] sm:$0xff]
  %v36 = vld [vmem:[%s0 + $0xe0] sm:$0xff]
  %v37 = vld [vmem:[%s0 + $0xe8] sm:$0xff]
  %v38 = vld [vmem:[%s0 + $0xf0] sm:$0xff]
  %v39 = vld [vmem:[%s0 + $0xf8] sm:$0xff]
  %v40 = vld [vmem:[%s0 + $0x100] sm:$0xff]
  %v41 = vld [vmem:[%s0 + $0x108] sm:$0xff]
  %v42 = vld [vmem:[%s0 + $0x110] sm:$0xff]
  %v43 = vld [vmem:[%s0 + $0x118] sm:$0xff]
  %v44 = vld [vmem:[%s0 + $0x120] sm:$0xff]
  %v45 = vld [vmem:[%s0 + $0x128] sm:$0xff]
  %v46 = vld [vmem:[%s0 + $0x130] sm:$0xff]
  %v47 = vld [vmem:[%s0 + $0x138] sm:$0xff]
  %v48 = vld [vmem:[%s0 + $0x140] sm:$0xff]
  %v49 = vld [vmem:[%s0 + $0x148] sm:$0xff]
  %v50 = vld [vmem:[%s0 + $0x150] sm:$0xff]
  %v51 = vld [vmem:[%s0 + $0x158] sm:$0xff]
  %v52 = vld [vmem:[%s0 + $0x160] sm:$0xff]
  %v53 = vld [vmem:[%s0 + $0x168] sm:$0xff]
  %v54 = vld [vmem:[%s0 + $0x170] sm:$0xff]
  %v55 = vld [vmem:[%s0 + $0x178] sm:$0xff]
  %v56 = vld [vmem:[%s0 + $0x180] sm:$0xff]
  %v57 = vld [vmem:[%s0 + $0x188] sm:$0xff]
  %v58 = vld [vmem:[%s0 + $0x190] sm:$0xff]
  %v59 = vld [vmem:[%s0 + $0x198] sm:$0xff]
  %v60 = vld [vmem:[%s0 + $0x1a0] sm:$0xff]
  %v61 = vld [vmem:[%s0 + $0x1a8] sm:$0xff]
  %v62 = vld [vmem:[%s0 + $0x1b0] sm:$0xff]
  %v63 = vld [vmem:[%s0 + $0x1b8] sm:$0xff]
  %v64 = vld [vmem:[%s0 + $0x1c0] sm:$0xff]
  %v65 = vld [vmem:[%s0 + $0x1c8] sm:$0xff]
  %v66 = vld [vmem:[%s0 + $0x1d0] sm:$0xff]
  %v67 = vld [vmem:[%s0 + $0x1d8] sm:$0xff]
  %v68 = vld [vmem:[%s0 + $0x1e0] sm:$0xff]
  %v69 = vld [vmem:[%s0 + $0x1e8] sm:$0xff]
  %v70 = vld [vmem:[%s0 + $0x1f0] sm:$0xff]
  %v71 = vld [vmem:[%s0 + $0x1f8] sm:$0xff]
  %v72 = vld [vmem:[%s0 + $0x200] sm:$0xff]
  %v73 = vmax.f32 %v8, 0.0
  %v74 = vmax.f32 %v9, 0.0
  %v75 = vmax.f32 %v10, 0.0
  %v76 = vmax.f32 %v11, 0.0
  %v77 = vmax.f32 %v12, 0.0
  %v78 = vmax.f32 %v13, 0.0
  %v79 = vmax.f32 %v14, 0.0
  %v80 = vmax.f32 %v15, 0.0
  %v81 = vmax.f32 %v16, 0.0
  %v82 = vmax.f32 %v17, 0.0
  %v83 = vmax.f32 %v18, 0.0
  %v84 = vmax.f32 %v19, 0.0
  %v85 = vmax.f32 %v20, 0.0
  %v86 = vmax.f32 %v21, 0.0
  %v87 = vmax.f32 %v22, 0.0
  %v88 = vmax.f32 %v23, 0.0
  %v89 = vmax.f32 %v24, 0.0
  %v90 = vmax.f32 %v25, 0.0
  %v91 = vmax.f32 %v26, 0.0
  %v92 = vmax.f32 %v27, 0.0
  %v93 = vmax.f32 %v28, 0.0
  %v94 = vmax.f32 %v29, 0.0
  %v95 = vmax.f32 %v30, 0.0
  %v96 = vmax.f32 %v31, 0.0
  %v97 = vmax.f32 %v32, 0.0
  %v98 = vmax.f32 %v33, 0.0
  %v99 = vmax.f32 %v34, 0.0
  %v100 = vmax.f32 %v35, 0.0
  %v101 = vmax.f32 %v36, 0.0
  %v102 = vmax.f32 %v37, 0.0
  %v103 = vmax.f32 %v38, 0.0
  %v104 = vmax.f32 %v39, 0.0
  %v105 = vmax.f32 %v40, 0.0
  %v106 = vmax.f32 %v41, 0.0
  %v107 = vmax.f32 %v42, 0.0
  %v108 = vmax.f32 %v43, 0.0
  %v109 = vmax.f32 %v44, 0.0
  %v110 = vmax.f32 %v45, 0.0
  %v111 = vmax.f32 %v46, 0.0
  %v112 = vmax.f32 %v47, 0.0
  %v113 = vmax.f32 %v48, 0.0
  %v114 = vmax.f32 %v49, 0.0
  %v115 = vmax.f32 %v50, 0.0
  %v116 = vmax.f32 %v51, 0.0
  %v117 = vmax.f32 %v52, 0.0
  %v118 = vmax.f32 %v53, 0.0
  %v119 = vmax.f32 %v54, 0.0
  %v120 = vmax.f32 %v55, 0.0
  %v121 = vmax.f32 %v56, 0.0
  %v122 = vmax.f32 %v57, 0.0
  %v123 = vmax.f32 %v58, 0.0
  %v124 = vmax.f32 %v59, 0.0
  %v125 = vmax.f32 %v60, 0.0
  %v126 = vmax.f32 %v61, 0.0
  %v127 = vmax.f32 %v62, 0.0
  %v128 = vmax.f32 %v63, 0.0
  %v129 = vmax.f32 %v64, 0.0
  %v130 = vmax.f32 %v65, 0.0
  %v131 = vmax.f32 %v66, 0.0
  %v132 = vmax.f32 %v67, 0.0
  %v133 = vmax.f32 %v68, 0.0
  %v134 = vmax.f32 %v69, 0.0
  %v135 = vmax.f32 %v70, 0.0
  %v136 = vmax.f32 %v71, 0.0
  %v137 = vmax.f32 %v72, 0.0
  %138 = vst [vmem:[%s1] sm:$0xff] %v73
  %139 = vst [vmem:[%s1 + $0x8] sm:$0xff] %v74
  %140 = vst [vmem:[%s1 + $0x10] sm:$0xff] %v75
  %141 = vst [vmem:[%s1 + $0x18] sm:$0xff] %v76
  %142 = vst [vmem:[%s1 + $0x20] sm:$0xff] %v77
  %143 = vst [vmem:[%s1 + $0x28] sm:$0xff] %v78
  %144 = vst [vmem:[%s1 + $0x30] sm:$0xff] %v79
  %145 = vst [vmem:[%s1 + $0x38] sm:$0xff] %v80
  %146 = vst [vmem:[%s1 + $0x40] sm:$0xff] %v81
  %147 = vst [vmem:[%s1 + $0x48] sm:$0xff] %v82
  %148 = vst [vmem:[%s1 + $0x50] sm:$0xff] %v83
  %149 = vst [vmem:[%s1 + $0x58] sm:$0xff] %v84
  %150 = vst [vmem:[%s1 + $0x60] sm:$0xff] %v85
  %151 = vst [vmem:[%s1 + $0x68] sm:$0xff] %v86
  %152 = vst [vmem:[%s1 + $0x70] sm:$0xff] %v87
  %153 = vst [vmem:[%s1 + $0x78] sm:$0xff] %v88
  %154 = vst [vmem:[%s1 + $0x80] sm:$0xff] %v89
  %155 = vst [vmem:[%s1 + $0x88] sm:$0xff] %v90
  %156 = vst [vmem:[%s1 + $0x90] sm:$0xff] %v91
  %157 = vst [vmem:[%s1 + $0x98] sm:$0xff] %v92
  %158 = vst [vmem:[%s1 + $0xa0] sm:$0xff] %v93
  %159 = vst [vmem:[%s1 + $0xa8] sm:$0xff] %v94
  %160 = vst [vmem:[%s1 + $0xb0] sm:$0xff] %v95
  %161 = vst [vmem:[%s1 + $0xb8] sm:$0xff] %v96
  %162 = vst [vmem:[%s1 + $0xc0] sm:$0xff] %v97
  %163 = vst [vmem:[%s1 + $0xc8] sm:$0xff] %v98
  %164 = vst [vmem:[%s1 + $0xd0] sm:$0xff] %v99
  %165 = vst [vmem:[%s1 + $0xd8] sm:$0xff] %v100
  %166 = vst [vmem:[%s1 + $0xe0] sm:$0xff] %v101
  %167 = vst [vmem:[%s1 + $0xe8] sm:$0xff] %v102
  %168 = vst [vmem:[%s1 + $0xf0] sm:$0xff] %v103
  %169 = vst [vmem:[%s1 + $0xf8] sm:$0xff] %v104
  %170 = vst [vmem:[%s1 + $0x100] sm:$0xff] %v105
  %171 = vst [vmem:[%s1 + $0x108] sm:$0xff] %v106
  %172 = vst [vmem:[%s1 + $0x110] sm:$0xff] %v107
  %173 = vst [vmem:[%s1 + $0x118] sm:$0xff] %v108
  %174 = vst [vmem:[%s1 + $0x120] sm:$0xff] %v109
  %175 = vst [vmem:[%s1 + $0x128] sm:$0xff] %v110
  %176 = vst [vmem:[%s1 + $0x130] sm:$0xff] %v111
  %177 = vst [vmem:[%s1 + $0x138] sm:$0xff] %v112
  %178 = vst [vmem:[%s1 + $0x140] sm:$0xff] %v113
  %179 = vst [vmem:[%s1 + $0x148] sm:$0xff] %v114
  %180 = vst [vmem:[%s1 + $0x150] sm:$0xff] %v115
  %181 = vst [vmem:[%s1 + $0x158] sm:$0xff] %v116
  %182 = vst [vmem:[%s1 + $0x160] sm:$0xff] %v117
  %183 = vst [vmem:[%s1 + $0x168] sm:$0xff] %v118
  %184 = vst [vmem:[%s1 + $0x170] sm:$0xff] %v119
  %185 = vst [vmem:[%s1 + $0x178] sm:$0xff] %v120
  %186 = vst [vmem:[%s1 + $0x180] sm:$0xff] %v121
  %187 = vst [vmem:[%s1 + $0x188] sm:$0xff] %v122
  %188 = vst [vmem:[%s1 + $0x190] sm:$0xff] %v123
  %189 = vst [vmem:[%s1 + $0x198] sm:$0xff] %v124
  %190 = vst [vmem:[%s1 + $0x1a0] sm:$0xff] %v125
  %191 = vst [vmem:[%s1 + $0x1a8] sm:$0xff] %v126
  %192 = vst [vmem:[%s1 + $0x1b0] sm:$0xff] %v127
  %193 = vst [vmem:[%s1 + $0x1b8] sm:$0xff] %v128
  %194 = vst [vmem:[%s1 + $0x1c0] sm:$0xff] %v129
  %195 = vst [vmem:[%s1 + $0x1c8] sm:$0xff] %v130
  %196 = vst [vmem:[%s1 + $0x1d0] sm:$0xff] %v131
  %197 = vst [vmem:[%s1 + $0x1d8] sm:$0xff] %v132
  %198 = vst [vmem:[%s1 + $0x1e0] sm:$0xff] %v133
  %199 = vst [vmem:[%s1 + $0x1e8] sm:$0xff] %v134
  %200 = vst [vmem:[%s1 + $0x1f0] sm:$0xff] %v135
  %201 = vst [vmem:[%s1 + $0x1f8] sm:$0xff] %v136
  %vm202 = vcmask 326656
  %203 = vst.msk [vmem:[%s1 + $0x200] sm:$0xff] %vm202, %v137
  // Predicated region
  $region6: #{relu_pallas.1} parent=0 // pred_check
    _
  $region7: #{relu_pallas.1} parent=0 // pred_check_branch
    %205 = sbr.rel (0) target = $region9
  $region8: #{relu_pallas.1} parent=0 // pred_region
    _
  $region9: #{relu_pallas.1} parent=0 // pred_fallthru
    _
  // Predicated region
  $region10: #{relu_pallas.1} parent=0 // pred_check
    _
  $region11: #{relu_pallas.1} parent=0 // pred_check_branch
    %207 = sbr.rel (0) target = $region13
  $region12: #{relu_pallas.1} parent=0 // pred_region
    _
  $region13: #{relu_pallas.1} parent=0 // pred_fallthru
    _

</llo_original>
